<compile_context>
chip_gen: v7x
topology: tpu7x:2x2x1
jax: 0.10.0
libtpu: 0.0.40
codegen_flags: <defaults>
</compile_context>

<pallas_src>
import jax
import jax.numpy as jnp
from jax.experimental import pallas as pl
from jax.experimental.pallas import tpu as pltpu

# ----- model dimensions (consistent with the synthetic Sequential) -----------
C, H, W = 4, 4, 4
D_IN = C * H * W      # 64 after Flatten
D_HID = 32
D_OUT = 10

LANE = 128
D_HID_PAD = LANE      # hidden padded to one full lane width
D_OUT_PAD = LANE      # lane-dense output -> unmasked vst
SUBLANE = 16          # bf16-safe batch alignment (16 rows per packed sublane tile)
TILE_B_MAX = 1024     # large tiles amortize the ~0.35 us per-grid-step overhead


def _round_up(n, m):
    return (n + m - 1) // m * m


def _choose_batch_tiling(b):
    """Pick a big batch tile, but keep >=2 grid steps when possible (v7x TCs)."""
    b_al = _round_up(max(b, 1), SUBLANE)
    if b_al >= 2 * SUBLANE:
        tile_b = min(TILE_B_MAX, _round_up(b_al // 2, SUBLANE))
    else:
        tile_b = b_al
    b_pad = _round_up(b_al, tile_b)
    return tile_b, b_pad


def mlp_kernel(x_ref, w1_ref, b1_ref, w2_ref, b2_ref, o_ref):
    """Fused Sequential forward on one (tile_b, D_IN) batch tile:
       o = relu(x @ W1 + b1) @ W2 + b2, f32 accumulation on the MXU."""
    x = x_ref[...].astype(jnp.bfloat16)                         # f32 in, cast on VPU
    # Linear 1 (MXU, f32 acc) + bias + ReLU (f32 VPU)
    h = jnp.dot(x, w1_ref[...], preferred_element_type=jnp.float32)
    h = jnp.maximum(h + b1_ref[...], 0.0)                       # b1 (1, 128) f32
    # Linear 2 (MXU, f32 acc) + bias; padded h columns are exactly 0
    y = jnp.dot(h.astype(jnp.bfloat16), w2_ref[...],
                preferred_element_type=jnp.float32)
    o_ref[...] = (y + b2_ref[...]).astype(o_ref.dtype)          # bf16 writeback


def prepare_padded_params(w1, b1, w2, b2):
    """One-time (init-path) zero-pad + bf16 cast of the weights; cached by caller.

    w1: (D_IN, D_HID), b1: (1, D_HID), w2: (D_HID, D_OUT), b2: (1, D_OUT)
    (weights stored transposed relative to torch.nn.Linear.weight, so y = x@W+b).
    """
    w1_p = jnp.zeros((D_IN, D_HID_PAD), jnp.bfloat16).at[:, :D_HID].set(
        w1.astype(jnp.bfloat16))
    b1_p = jnp.zeros((1, D_HID_PAD), jnp.float32).at[0, :D_HID].set(b1.reshape(-1))
    w2_p = jnp.zeros((D_HID_PAD, D_OUT_PAD), jnp.bfloat16).at[:D_HID, :D_OUT].set(
        w2.astype(jnp.bfloat16))
    b2_p = jnp.zeros((1, D_OUT_PAD), jnp.float32).at[0, :D_OUT].set(b2.reshape(-1))
    return w1_p, b1_p, w2_p, b2_p


def torch_train_manager_forward(x_nchw, padded_params):
    """Equivalent of TorchTrainManager.forward: run the Sequential net.

    x_nchw: (B, C, H, W) float32 -> flattened to (B, D_IN) (Flatten layer, glue).
    padded_params: output of prepare_padded_params (pre-padded, pre-cast once).
    """
    w1_p, b1_p, w2_p, b2_p = padded_params
    b = x_nchw.shape[0]
    x = x_nchw.reshape(b, -1).astype(jnp.float32)               # Flatten (glue)

    tile_b, b_pad = _choose_batch_tiling(b)
    if b_pad != b:                                              # pad batch only if needed
        x = jnp.zeros((b_pad, D_IN), jnp.float32).at[:b].set(x)

    grid = (b_pad // tile_b,)
    flops = 2 * b_pad * D_IN * D_HID_PAD + 2 * b_pad * D_HID_PAD * D_OUT_PAD
    bytes_accessed = (b_pad * D_IN * 4                 # x read (f32)
                      + w1_p.size * 2 + w2_p.size * 2  # weights (bf16)
                      + b1_p.size * 4 + b2_p.size * 4  # biases (f32)
                      + b_pad * D_OUT_PAD * 2)         # output writeback (bf16)

    out_pad = pl.pallas_call(
        mlp_kernel,
        out_shape=jax.ShapeDtypeStruct((b_pad, D_OUT_PAD), jnp.bfloat16),
        grid_spec=pl.GridSpec(
            grid=grid,
            in_specs=[
                pl.BlockSpec((tile_b, D_IN), lambda i: (i, 0)),        # x: batch-tiled
                pl.BlockSpec((D_IN, D_HID_PAD), lambda i: (0, 0)),     # W1: resident
                pl.BlockSpec((1, D_HID_PAD), lambda i: (0, 0)),        # b1: resident
                pl.BlockSpec((D_HID_PAD, D_OUT_PAD), lambda i: (0, 0)),  # W2: resident
                pl.BlockSpec((1, D_OUT_PAD), lambda i: (0, 0)),        # b2: resident
            ],
            out_specs=pl.BlockSpec((tile_b, D_OUT_PAD), lambda i: (i, 0)),
        ),
        compiler_params=pltpu.CompilerParams(
            dimension_semantics=("parallel",),   # shard batch tiles across TCs (v7x)
        ),
        cost_estimate=pl.CostEstimate(
            flops=flops, transcendentals=0, bytes_accessed=bytes_accessed),
    )(x, w1_p, b1_p, w2_p, b2_p)

    # Slice + upcast fused into one pass; downstream that tolerates the padded
    # bf16 (b_pad, 128) layout can consume out_pad directly and skip this.
    return out_pad[:b, :D_OUT].astype(jnp.float32)


def init_params(key):
    """Deterministic parameter init (matches PyTorch Linear shapes, transposed)."""
    k1, k2, k3, k4 = jax.random.split(key, 4)
    bound1 = 1.0 / jnp.sqrt(D_IN)
    bound2 = 1.0 / jnp.sqrt(D_HID)
    w1 = jax.random.uniform(k1, (D_IN, D_HID), jnp.float32, -bound1, bound1)
    b1 = jax.random.uniform(k2, (1, D_HID), jnp.float32, -bound1, bound1)
    w2 = jax.random.uniform(k3, (D_HID, D_OUT), jnp.float32, -bound2, bound2)
    b2 = jax.random.uniform(k4, (1, D_OUT), jnp.float32, -bound2, bound2)
    return w1, b1, w2, b2


if __name__ == "__main__":
    key = jax.random.PRNGKey(0)
    kx, kp = jax.random.split(key)
    B = 256                                   # -> 2 batch tiles of 128, grid=(2,)
    x = jax.random.normal(kx, (B, C, H, W), jnp.float32)   # NCHW like PyTorch
    w1, b1, w2, b2 = init_params(kp)

    # Padding / casting of the weights happens once here (init path), not per call.
    padded_params = jax.tree_util.tree_map(jax.block_until_ready,
                                           prepare_padded_params(w1, b1, w2, b2))

    out = torch_train_manager_forward(x, padded_params)
    out = jax.block_until_ready(out)

    # Reference check in plain f32 JAX (same math the Sequential would do);
    # loose tolerance accounts for bf16 input/weight/output rounding in the kernel.
    xf = x.reshape(B, -1)
    ref = jnp.maximum(xf @ w1 + b1, 0.0) @ w2 + b2
    assert out.shape == (B, D_OUT)
    assert jnp.allclose(out, ref, atol=3e-2, rtol=3e-2)

    # TODO(synk): optimizer / loss / dataloader / tensorboard / profiler plumbing
    # in __init__ is host-side training management with no kernel equivalent;
    # only the forward pass (neuralNet) is implemented.
    print("KERNEL_OK")
</pallas_src>

<mosaic_0001>
module attributes {stable_mosaic.version = 11 : i64} {
  func.func @mlp_kernel(%arg0: i32, %arg1: memref<128x64xf32, #tpu.memory_space<vmem>>, %arg2: memref<64x128xbf16, #tpu.memory_space<vmem>>, %arg3: memref<1x128xf32, #tpu.memory_space<vmem>>, %arg4: memref<128x128xbf16, #tpu.memory_space<vmem>>, %arg5: memref<1x128xf32, #tpu.memory_space<vmem>>, %arg6: memref<128x128xbf16, #tpu.memory_space<vmem>>) attributes {dimension_semantics = [#tpu.dimension_semantics<parallel>], iteration_bounds = array<i64: 2>, scalar_prefetch = 0 : i64, scratch_operands = 0 : i64, tpu.core_type = #tpu.core_type<tc>, window_params = [{transform_indices = @transform_0, window_bounds = array<i64: 128, 64>}, {pipeline_mode = #tpu.pipeline_mode<synchronous>, transform_indices = @transform_1, window_bounds = array<i64: 64, 128>}, {pipeline_mode = #tpu.pipeline_mode<synchronous>, transform_indices = @transform_2, window_bounds = array<i64: 1, 128>}, {pipeline_mode = #tpu.pipeline_mode<synchronous>, transform_indices = @transform_3, window_bounds = array<i64: 128, 128>}, {pipeline_mode = #tpu.pipeline_mode<synchronous>, transform_indices = @transform_4, window_bounds = array<i64: 1, 128>}, {transform_indices = @transform_5, window_bounds = array<i64: 128, 128>}]} {
    %c0 = arith.constant 0 : index
    %c0_0 = arith.constant 0 : index
    %0 = vector.load %arg1[%c0, %c0_0] : memref<128x64xf32, #tpu.memory_space<vmem>>, vector<128x64xf32>
    %1 = arith.truncf %0 : vector<128x64xf32> to vector<128x64xbf16>
    %c0_1 = arith.constant 0 : index
    %c0_2 = arith.constant 0 : index
    %2 = vector.load %arg2[%c0_1, %c0_2] : memref<64x128xbf16, #tpu.memory_space<vmem>>, vector<64x128xbf16>
    %cst = arith.constant dense<0.000000e+00> : vector<128x128xf32>
    %3 = tpu.matmul %1, %2, %cst {dimension_numbers = #tpu.dot_dimension_numbers<[1], [0], [0], [1], [0, 0, 1, 1], [], []>} : vector<128x64xbf16>, vector<64x128xbf16>, vector<128x128xf32> -> vector<128x128xf32>
    %c0_3 = arith.constant 0 : index
    %c0_4 = arith.constant 0 : index
    %4 = vector.load %arg3[%c0_3, %c0_4] : memref<1x128xf32, #tpu.memory_space<vmem>>, vector<1x128xf32>
    %5 = vector.broadcast %4 : vector<1x128xf32> to vector<128x128xf32>
    %6 = arith.addf %3, %5 : vector<128x128xf32>
    %cst_5 = arith.constant 0.000000e+00 : f32
    %7 = vector.broadcast %cst_5 : f32 to vector<128x128xf32>
    %8 = arith.maximumf %6, %7 : vector<128x128xf32>
    %9 = arith.truncf %8 : vector<128x128xf32> to vector<128x128xbf16>
    %c0_6 = arith.constant 0 : index
    %c0_7 = arith.constant 0 : index
    %10 = vector.load %arg4[%c0_6, %c0_7] : memref<128x128xbf16, #tpu.memory_space<vmem>>, vector<128x128xbf16>
    %cst_8 = arith.constant dense<0.000000e+00> : vector<128x128xf32>
    %11 = tpu.matmul %9, %10, %cst_8 {dimension_numbers = #tpu.dot_dimension_numbers<[1], [0], [0], [1], [0, 0, 1, 1], [], []>} : vector<128x128xbf16>, vector<128x128xbf16>, vector<128x128xf32> -> vector<128x128xf32>
    %c0_9 = arith.constant 0 : index
    %c0_10 = arith.constant 0 : index
    %12 = vector.load %arg5[%c0_9, %c0_10] : memref<1x128xf32, #tpu.memory_space<vmem>>, vector<1x128xf32>
    %13 = vector.broadcast %12 : vector<1x128xf32> to vector<128x128xf32>
    %14 = arith.addf %11, %13 : vector<128x128xf32>
    %15 = arith.truncf %14 : vector<128x128xf32> to vector<128x128xbf16>
    %c0_11 = arith.constant 0 : index
    %c0_12 = arith.constant 0 : index
    %16 = vector.load %arg6[%c0_11, %c0_12] : memref<128x128xbf16, #tpu.memory_space<vmem>>, vector<128x128xbf16>
    tpu.vector_store %arg6[%c0_11, %c0_12], %15 {strides = array<i32>} : memref<128x128xbf16, #tpu.memory_space<vmem>>, vector<128x128xbf16>,
    return
  }
  func.func @transform_0(%arg0: i32) -> (i32, i32) {
    %c0_i32 = arith.constant 0 : i32
    %c0_i32_0 = arith.constant 0 : i32
    return %arg0, %c0_i32 : i32, i32
  }
  func.func @transform_1(%arg0: i32) -> (i32, i32) {
    %c0_i32 = arith.constant 0 : i32
    %c0_i32_0 = arith.constant 0 : i32
    %c0_i32_1 = arith.constant 0 : i32
    return %c0_i32, %c0_i32_0 : i32, i32
  }
  func.func @transform_2(%arg0: i32) -> (i32, i32) {
    %c0_i32 = arith.constant 0 : i32
    %c0_i32_0 = arith.constant 0 : i32
    %c0_i32_1 = arith.constant 0 : i32
    return %c0_i32, %c0_i32_0 : i32, i32
  }
  func.func @transform_3(%arg0: i32) -> (i32, i32) {
    %c0_i32 = arith.constant 0 : i32
    %c0_i32_0 = arith.constant 0 : i32
    %c0_i32_1 = arith.constant 0 : i32
    return %c0_i32, %c0_i32_0 : i32, i32
  }
  func.func @transform_4(%arg0: i32) -> (i32, i32) {
    %c0_i32 = arith.constant 0 : i32
    %c0_i32_0 = arith.constant 0 : i32
    %c0_i32_1 = arith.constant 0 : i32
    return %c0_i32, %c0_i32_0 : i32, i32
  }
  func.func @transform_5(%arg0: i32) -> (i32, i32) {
    %c0_i32 = arith.constant 0 : i32
    %c0_i32_0 = arith.constant 0 : i32
    return %arg0, %c0_i32 : i32, i32
  }
}

</mosaic_0001>

<llo_original>
// kernel: tpu_custom_call.1
$region0: #{tpu_custom_call.1}
  #allocation0 [shape = 'u32[]', space=smem, size = 0x4, offset = 0x4, fixed_abs, tag = 'smem constant byte address 0x4 - core index']
  #allocation1 [shape = 'u32[144,128]{1,0:T(1,128)}', space=vmem, size = 0x12000, scoped, tag = 'internal scratch']
  %s0 = inlined_call_operand.vmem [shape: f32[256,64], index: 0, kind: input, shape index: {}]
  %s1 = inlined_call_operand.vmem [shape: bf16[64,128], index: 1, kind: input, shape index: {}]
  %s2 = inlined_call_operand.vmem [shape: f32[1,128], index: 2, kind: input, shape index: {}]
  %s3 = inlined_call_operand.vmem [shape: bf16[128,128], index: 3, kind: input, shape index: {}]
  %s4 = inlined_call_operand.vmem [shape: f32[1,128], index: 4, kind: input, shape index: {}]
  %s5 = inlined_call_operand.hbm [shape: bf16[256,128], index: 5, kind: output, shape index: {}]
  %s6 = sld [smem:[#allocation0]]
  $region53: #{tpu_custom_call.1} parent=0
    _
  %s8 = ssub.s32 1, %s6
  %s9 = scalar_select 0, %s8, %s6
  $region1: #{tpu_custom_call.1} parent=0
    #allocation2 [shape = 'u8[65536]{0}', space=vmem, size = 0x10000, scoped, tag = 'output window, operand 0']
    #allocation3 [shape = 's32[2]{0}', space=sflag, size = 0x8, scoped, tag = 'scoped memory for tpu_custom_call.1']
    %10 = vsyncpa [#allocation3], 0
    %s11 = scalar_lea.sflag [#allocation3], 1
    %12 = vsyncpa %s11, 0
    loop: start=0, step=1, limit=4
    $region2: #{tpu_custom_call.1} parent=1 // loop_pre_header
      _
    $region3: #{tpu_custom_call.1} parent=1 // loop_header
      %s14 = sphi 0, %s18
      %p15 = scmp.ge.s32.totalorder %s14, 4
      %s24 = sphi 0, %s26
      %s27 = sphi 0, %s24
      %s28 = sphi 0, %s27
      %s44 = sphi 0, %s28
      %s48 = sphi 0, %s48
      %s50 = sphi 0, %s48
      %s51 = sphi 0, %s50
      %s65 = sphi 0, %s51
      %s69 = sphi 0, %s69
      %s71 = sphi 0, %s69
      %s72 = sphi 0, %s71
      %s86 = sphi 0, %s72
      %s90 = sphi 0, %s90
      %s92 = sphi 0, %s90
      %s93 = sphi 0, %s92
      %s107 = sphi 0, %s93
      %s111 = sphi 0, %s111
      %s113 = sphi 0, %s111
      %s114 = sphi 0, %s113
      %s128 = sphi 0, %s114
      %s134 = sphi 0, %s136
      %s137 = sphi 0, %s134
      %s138 = sphi 0, %s137
      %s154 = sphi 0, %s138
    $region4: #{tpu_custom_call.1} parent=1 // loop_header_branch
      %17 = sbr.rel (%p15) target = $region8
    $region5: #{tpu_custom_call.1} parent=1 // loop_body
      %s19 = ssub.s32 %s14, 1
      %s20 = ssub.s32 %s14, 2
      %s21 = sadd.s32 %s14, 1
      %s22 = ssub.s32 %s14, %s21
      %p23 = scmp.eq.s32.totalorder %s22, 0
      %s25 = sadd.s32 %s24, 1
      %s26 = scalar_select %p23, %s24, %s25
      %p29 = pneg %p23
      %p30 = scmp.eq.s32.totalorder %s14, 1
      %p31 = por %p29, %p30
      %p32 = scmp.ne.s32.totalorder %s24, %s27
      %p33 = scmp.eq.s32.totalorder %s14, 0
      %p34 = por %p32, %p33
      %p35 = scmp.ne.s32.totalorder %s24, %s27
      %p36 = scmp.eq.s32.totalorder %s19, 1
      %p37 = por %p35, %p36
      %p38 = scmp.ne.s32.totalorder %s27, %s28
      %p39 = scmp.eq.s32.totalorder %s19, 0
      %p40 = por %p38, %p39
      %p41 = scmp.ne.s32.totalorder %s27, %s28
      %p42 = scmp.eq.s32.totalorder %s20, 1
      %p43 = por %p41, %p42
      %p45 = scmp.ne.s32.totalorder %s28, %s44
      %p46 = scmp.eq.s32.totalorder %s20, 0
      %p47 = por %p45, %p46
      %s49 = sadd.s32 %s48, 1
      %p52 = scmp.eq.s32.totalorder %s14, 1
      %p53 = scmp.ne.s32.totalorder %s48, %s50
      %p54 = scmp.eq.s32.totalorder %s14, 0
      %p55 = por %p53, %p54
      %p56 = scmp.ne.s32.totalorder %s48, %s50
      %p57 = scmp.eq.s32.totalorder %s19, 1
      %p58 = por %p56, %p57
      %p59 = scmp.ne.s32.totalorder %s50, %s51
      %p60 = scmp.eq.s32.totalorder %s19, 0
      %p61 = por %p59, %p60
      %p62 = scmp.ne.s32.totalorder %s50, %s51
      %p63 = scmp.eq.s32.totalorder %s20, 1
      %p64 = por %p62, %p63
      %p66 = scmp.ne.s32.totalorder %s51, %s65
      %p67 = scmp.eq.s32.totalorder %s20, 0
      %p68 = por %p66, %p67
      %s70 = sadd.s32 %s69, 1
      %p73 = scmp.eq.s32.totalorder %s14, 1
      %p74 = scmp.ne.s32.totalorder %s69, %s71
      %p75 = scmp.eq.s32.totalorder %s14, 0
      %p76 = por %p74, %p75
      %p77 = scmp.ne.s32.totalorder %s69, %s71
      %p78 = scmp.eq.s32.totalorder %s19, 1
      %p79 = por %p77, %p78
      %p80 = scmp.ne.s32.totalorder %s71, %s72
      %p81 = scmp.eq.s32.totalorder %s19, 0
      %p82 = por %p80, %p81
      %p83 = scmp.ne.s32.totalorder %s71, %s72
      %p84 = scmp.eq.s32.totalorder %s20, 1
      %p85 = por %p83, %p84
      %p87 = scmp.ne.s32.totalorder %s72, %s86
      %p88 = scmp.eq.s32.totalorder %s20, 0
      %p89 = por %p87, %p88
      %s91 = sadd.s32 %s90, 1
      %p94 = scmp.eq.s32.totalorder %s14, 1
      %p95 = scmp.ne.s32.totalorder %s90, %s92
      %p96 = scmp.eq.s32.totalorder %s14, 0
      %p97 = por %p95, %p96
      %p98 = scmp.ne.s32.totalorder %s90, %s92
      %p99 = scmp.eq.s32.totalorder %s19, 1
      %p100 = por %p98, %p99
      %p101 = scmp.ne.s32.totalorder %s92, %s93
      %p102 = scmp.eq.s32.totalorder %s19, 0
      %p103 = por %p101, %p102
      %p104 = scmp.ne.s32.totalorder %s92, %s93
      %p105 = scmp.eq.s32.totalorder %s20, 1
      %p106 = por %p104, %p105
      %p108 = scmp.ne.s32.totalorder %s93, %s107
      %p109 = scmp.eq.s32.totalorder %s20, 0
      %p110 = por %p108, %p109
      %s112 = sadd.s32 %s111, 1
      %p115 = scmp.eq.s32.totalorder %s14, 1
      %p116 = scmp.ne.s32.totalorder %s111, %s113
      %p117 = scmp.eq.s32.totalorder %s14, 0
      %p118 = por %p116, %p117
      %p119 = scmp.ne.s32.totalorder %s111, %s113
      %p120 = scmp.eq.s32.totalorder %s19, 1
      %p121 = por %p119, %p120
      %p122 = scmp.ne.s32.totalorder %s113, %s114
      %p123 = scmp.eq.s32.totalorder %s19, 0
      %p124 = por %p122, %p123
      %p125 = scmp.ne.s32.totalorder %s113, %s114
      %p126 = scmp.eq.s32.totalorder %s20, 1
      %p127 = por %p125, %p126
      %p129 = scmp.ne.s32.totalorder %s114, %s128
      %p130 = scmp.eq.s32.totalorder %s20, 0
      %p131 = por %p129, %p130
      %s132 = ssub.s32 %s14, %s21
      %p133 = scmp.eq.s32.totalorder %s132, 0
      %s135 = sadd.s32 %s134, 1
      %s136 = scalar_select %p133, %s134, %s135
      %p139 = pneg %p133
      %p140 = scmp.eq.s32.totalorder %s14, 1
      %p141 = por %p139, %p140
      %p142 = scmp.ne.s32.totalorder %s134, %s137
      %p143 = scmp.eq.s32.totalorder %s14, 0
      %p144 = por %p142, %p143
      %p145 = scmp.ne.s32.totalorder %s134, %s137
      %p146 = scmp.eq.s32.totalorder %s19, 1
      %p147 = por %p145, %p146
      %p148 = scmp.ne.s32.totalorder %s137, %s138
      %p149 = scmp.eq.s32.totalorder %s19, 0
      %p150 = por %p148, %p149
      %p151 = scmp.ne.s32.totalorder %s137, %s138
      %p152 = scmp.eq.s32.totalorder %s20, 1
      %p153 = por %p151, %p152
      %p155 = scmp.ne.s32.totalorder %s138, %s154
      %p156 = scmp.eq.s32.totalorder %s20, 0
      %p157 = por %p155, %p156
      %p158 = scmp.le.s32.totalorder 1, %s14
      %p159 = scmp.lt.s32.totalorder %s14, 3
      %p160 = pnand %p158, %p159
      %p161 = pneg %p160
      // Predicated region
      $region9: #{tpu_custom_call.1} parent=5 // pred_check
        _
      $region10: #{tpu_custom_call.1} parent=5 // pred_check_branch
        %163 = sbr.rel (%p160) target = $region12
      $region11: #{tpu_custom_call.1} parent=5 // pred_region
        %s164 = ssub.s32 %s14, 1
        // Predicated region
        $region13: #{tpu_custom_call.1} parent=11 // pred_check
          %p165 = pneg %p61
        $region14: #{tpu_custom_call.1} parent=11 // pred_check_branch
          %167 = sbr.rel (%p165) target = $region16
        $region15: #{tpu_custom_call.1} parent=11 // pred_region
          _
        $region16: #{tpu_custom_call.1} parent=11 // pred_fallthru
          _
        // Predicated region
        $region17: #{tpu_custom_call.1} parent=11 // pred_check
          %p168 = pneg %p82
        $region18: #{tpu_custom_call.1} parent=11 // pred_check_branch
          %170 = sbr.rel (%p168) target = $region20
        $region19: #{tpu_custom_call.1} parent=11 // pred_region
          _
        $region20: #{tpu_custom_call.1} parent=11 // pred_fallthru
          _
        // Predicated region
        $region21: #{tpu_custom_call.1} parent=11 // pred_check
          %p171 = pneg %p103
        $region22: #{tpu_custom_call.1} parent=11 // pred_check_branch
          %173 = sbr.rel (%p171) target = $region24
        $region23: #{tpu_custom_call.1} parent=11 // pred_region
          _
        $region24: #{tpu_custom_call.1} parent=11 // pred_fallthru
          _
        // Predicated region
        $region25: #{tpu_custom_call.1} parent=11 // pred_check
          %p174 = pneg %p124
        $region26: #{tpu_custom_call.1} parent=11 // pred_check_branch
          %176 = sbr.rel (%p174) target = $region28
        $region27: #{tpu_custom_call.1} parent=11 // pred_region
          _
        $region28: #{tpu_custom_call.1} parent=11 // pred_fallthru
          _
      $region12: #{tpu_custom_call.1} parent=5 // pred_fallthru
        _
      %p177 = scmp.lt.s32.totalorder %s14, 2
      // Predicated region
      $region29: #{tpu_custom_call.1} parent=5 // pred_check
        %p178 = pneg %p177
      $region30: #{tpu_custom_call.1} parent=5 // pred_check_branch
        %180 = sbr.rel (%p178) target = $region32
      $region31: #{tpu_custom_call.1} parent=5 // pred_region
        // Predicated region
        $region33: #{tpu_custom_call.1} parent=31 // pred_check
          %p181 = pneg %p34
        $region34: #{tpu_custom_call.1} parent=31 // pred_check_branch
          %183 = sbr.rel (%p181) target = $region36
        $region35: #{tpu_custom_call.1} parent=31 // pred_region
          %s184 = smul.u32 16, %s14
          %p185 = scmp.lt.s32.totalorder %s184, 31
          %s186 = scalar_select %p185, %s184, 31
          %s187 = smul.addr %s186, 8
          %s188 = scalar_lea.vmem %s0, %s187
          %s189 = smul.u32 16, %s14
        $region36: #{tpu_custom_call.1} parent=31 // pred_fallthru
          _
      $region32: #{tpu_custom_call.1} parent=5 // pred_fallthru
        _
      %p190 = scmp.le.s32.totalorder 1, %s14
      %p191 = scmp.lt.s32.totalorder %s14, 3
      %p192 = pnand %p190, %p191
      %p193 = pneg %p192
      // Predicated region
      $region37: #{tpu_custom_call.1} parent=5 // pred_check
        _
      $region38: #{tpu_custom_call.1} parent=5 // pred_check_branch
        %195 = sbr.rel (%p192) target = $region40
      $region39: #{tpu_custom_call.1} parent=5 // pred_region
        %s196 = ssub.s32 %s14, 1
        %s197 = smul.u32 16, %s19
        %p198 = scmp.lt.s32.totalorder %s197, 31
        %s199 = scalar_select %p198, %s197, 31
        %s200 = smul.addr %s199, 8
        %s201 = scalar_lea.vmem %s0, %s200
        %p202 = pneg %p40
        %p203 = pneg %p37
        %p204 = pneg %p61
        %p205 = pneg %p58
        %p206 = pneg %p82
        %p207 = pneg %p79
        %p208 = pneg %p103
        %p209 = pneg %p100
        %p210 = pneg %p124
        %p211 = pneg %p121
        %p212 = pneg %p150
        %p213 = pneg %p147
        %s214 = sand.u32 %s137, 1
        %s215 = scalar_lea.sflag [#allocation3], %s214
        %s216 = sand.u32 %s137, 1
        %s217 = smul.addr %s216, 64
        %s218 = scalar_lea.vmem [#allocation2], %s217
        %s219 = smul.u32 16, %s19
        %p220 = scmp.lt.s32.totalorder %s219, 31
        %s221 = scalar_select %p220, %s219, 31
        %s222 = smul.addr %s221, 8
        %s223 = scalar_lea.vmem %s0, %s222
        %s224 = smul.u32 16, %s19
        %s225 = smul.u32 16, %s19
        %v227 = vld [vmem:[%s223] sm:$0xff]
        %v228 = vld [vmem:[%s223 + $0x8] sm:$0xff]
        %v229 = vld [vmem:[%s223 + $0x10] sm:$0xff]
        %v230 = vld [vmem:[%s223 + $0x18] sm:$0xff]
        %v231 = vld [vmem:[%s223 + $0x20] sm:$0xff]
        %v232 = vld [vmem:[%s223 + $0x28] sm:$0xff]
        %v233 = vld [vmem:[%s223 + $0x30] sm:$0xff]
        %v234 = vld [vmem:[%s223 + $0x38] sm:$0xff]
        %v235 = vld [vmem:[%s223 + $0x40] sm:$0xff]
        %v236 = vld [vmem:[%s223 + $0x48] sm:$0xff]
        %v237 = vld [vmem:[%s223 + $0x50] sm:$0xff]
        %v238 = vld [vmem:[%s223 + $0x58] sm:$0xff]
        %v239 = vld [vmem:[%s223 + $0x60] sm:$0xff]
        %v240 = vld [vmem:[%s223 + $0x68] sm:$0xff]
        %v241 = vld [vmem:[%s223 + $0x70] sm:$0xff]
        %v242 = vld [vmem:[%s223 + $0x78] sm:$0xff]
        %v243 = vpack.c.bf16 %v228, %v227
        %v244 = vpack.c.bf16 %v230, %v229
        %v245 = vpack.c.bf16 %v232, %v231
        %v246 = vpack.c.bf16 %v234, %v233
        %v247 = vpack.c.bf16 %v236, %v235
        %v248 = vpack.c.bf16 %v238, %v237
        %v249 = vpack.c.bf16 %v240, %v239
        %v250 = vpack.c.bf16 %v242, %v241
        %v251 = vld [vmem:[%s1] sm:$0xf]
        %v252 = vld [vmem:[%s1 + $0x4] sm:$0xf]
        %v253 = vld [vmem:[%s1 + $0x8] sm:$0xf]
        %v254 = vld [vmem:[%s1 + $0xc] sm:$0xf]
        %v255 = vld [vmem:[%s1 + $0x10] sm:$0xf]
        %v256 = vld [vmem:[%s1 + $0x14] sm:$0xf]
        %v257 = vld [vmem:[%s1 + $0x18] sm:$0xf]
        %v258 = vld [vmem:[%s1 + $0x1c] sm:$0xf]
        %v259 = vld [vmem:[%s2] sm:$0x1]
        %v261 = vlaneseq
        %v262 = vshrl.u32 %v261, 7
        %v263 = vsub.s32 0, %v262
        %v264 = vrot.slane %v259, %v263
        %v274 = vunpack.c.l.b16 %v251
        %v275 = vunpack.c.l.b16 %v252
        %v276 = vunpack.c.l.b16 %v253
        %v277 = vunpack.c.l.b16 %v254
        %v278 = vunpack.c.l.b16 %v255
        %v279 = vunpack.c.l.b16 %v256
        %v280 = vunpack.c.l.b16 %v257
        %v281 = vunpack.c.l.b16 %v258
        %v282 = vpack.c.b16 %v275, %v274
        %v283 = vpack.c.b16 %v277, %v276
        %v284 = vpack.c.b16 %v279, %v278
        %v285 = vpack.c.b16 %v281, %v280
        %vm290 = vcmask 523264
        %v292 = vsel %vm290, %v243, 0
        %v295 = vsel %vm290, %v244, 0
        %v298 = vsel %vm290, %v245, 0
        %v301 = vsel %vm290, %v246, 0
        %v304 = vsel %vm290, %v247, 0
        %v307 = vsel %vm290, %v248, 0
        %v310 = vsel %vm290, %v249, 0
        %v313 = vsel %vm290, %v250, 0
        %315 = vmatprep.subr.bf16.mxu0 0
        %316 = vmatpush1.bf16.msra.mxu0 %v282
        %317 = vmatprep.subr.bf16.mxu0 0
        %318 = vmatpush1.bf16.msra.mxu0 %v283
        %319 = vmatprep.subr.bf16.mxu0 0
        %320 = vmatpush1.bf16.msra.mxu0 %v284
        %321 = vmatprep.subr.bf16.mxu0 0
        %322 = vmatpush1.bf16.msra.mxu0 %v285
        %323 = vmatprep.subr.bf16.mxu0 0
        %324 = vmatpush1.bf16.msra.mxu0 0
        %325 = vmatprep.subr.bf16.mxu0 0
        %326 = vmatpush1.bf16.msra.mxu0 0
        %327 = vmatprep.subr.bf16.mxu0 0
        %328 = vmatpush1.bf16.msra.mxu0 0
        %329 = vmatprep.subr.bf16.mxu0 0
        %330 = vmatpush1.bf16.msra.mxu0 0
        %331 = vmatprep.subr.bf16.mxu0 0
        %332 = vmatpush1.bf16.msra.mxu0 0
        %333 = vmatprep.subr.bf16.mxu0 0
        %334 = vmatpush1.bf16.msra.mxu0 0
        %335 = vmatprep.subr.bf16.mxu0 0
        %336 = vmatpush1.bf16.msra.mxu0 0
        %337 = vmatprep.subr.bf16.mxu0 0
        %338 = vmatpush1.bf16.msra.mxu0 0
        %339 = vmatprep.subr.bf16.mxu0 0
        %340 = vmatpush1.bf16.msra.mxu0 0
        %341 = vmatprep.subr.bf16.mxu0 0
        %342 = vmatpush1.bf16.msra.mxu0 0
        %343 = vmatprep.subr.bf16.mxu0 0
        %344 = vmatpush1.bf16.msra.mxu0 0
        %345 = vmatprep.subr.bf16.mxu0 0
        %346 = vmatpush1.bf16.msra.mxu0 0
        %347 = vmatprep.mubr.bf16.mxu0 0
        %348 = vmatmul.mubr.bf16.gmra.mrb[0].mxu0 %v292
        %v349 = vpop.f32.mrb[0].mxu0
        %v350 = vadd.f32 %v264, %v349
        %v351 = vpop.f32.mrb[0].mxu0
        %v352 = vpop.f32.mrb[0].mxu0
        %v353 = vadd.f32 %v264, %v352
        %v354 = vpop.f32.mrb[0].mxu0
        %355 = vmatprep.mubr.bf16.mxu0 0
        %356 = vmatmul.mubr.bf16.gmra.mrb[0].mxu0 %v295
        %v357 = vpop.f32.mrb[0].mxu0
        %v358 = vadd.f32 %v264, %v357
        %v359 = vpop.f32.mrb[0].mxu0
        %v360 = vpop.f32.mrb[0].mxu0
        %v361 = vadd.f32 %v264, %v360
        %v362 = vpop.f32.mrb[0].mxu0
        %363 = vmatprep.mubr.bf16.mxu0 0
        %364 = vmatmul.mubr.bf16.gmra.mrb[0].mxu0 %v298
        %v365 = vpop.f32.mrb[0].mxu0
        %v366 = vadd.f32 %v264, %v365
        %v367 = vpop.f32.mrb[0].mxu0
        %v368 = vpop.f32.mrb[0].mxu0
        %v369 = vadd.f32 %v264, %v368
        %v370 = vpop.f32.mrb[0].mxu0
        %371 = vmatprep.mubr.bf16.mxu0 0
        %372 = vmatmul.mubr.bf16.gmra.mrb[0].mxu0 %v301
        %v373 = vpop.f32.mrb[0].mxu0
        %v374 = vadd.f32 %v264, %v373
        %v375 = vpop.f32.mrb[0].mxu0
        %v376 = vpop.f32.mrb[0].mxu0
        %v377 = vadd.f32 %v264, %v376
        %v378 = vpop.f32.mrb[0].mxu0
        %379 = vmatprep.mubr.bf16.mxu0 0
        %380 = vmatmul.mubr.bf16.gmra.mrb[0].mxu0 %v304
        %v381 = vpop.f32.mrb[0].mxu0
        %v382 = vadd.f32 %v264, %v381
        %v383 = vpop.f32.mrb[0].mxu0
        %v384 = vpop.f32.mrb[0].mxu0
        %v385 = vadd.f32 %v264, %v384
        %v386 = vpop.f32.mrb[0].mxu0
        %387 = vmatprep.mubr.bf16.mxu0 0
        %388 = vmatmul.mubr.bf16.gmra.mrb[0].mxu0 %v307
        %v389 = vpop.f32.mrb[0].mxu0
        %v390 = vadd.f32 %v264, %v389
        %v391 = vpop.f32.mrb[0].mxu0
        %v392 = vpop.f32.mrb[0].mxu0
        %v393 = vadd.f32 %v264, %v392
        %v394 = vpop.f32.mrb[0].mxu0
        %395 = vmatprep.mubr.bf16.mxu0 0
        %396 = vmatmul.mubr.bf16.gmra.mrb[0].mxu0 %v310
        %v397 = vpop.f32.mrb[0].mxu0
        %v398 = vadd.f32 %v264, %v397
        %v399 = vpop.f32.mrb[0].mxu0
        %v400 = vpop.f32.mrb[0].mxu0
        %v401 = vadd.f32 %v264, %v400
        %v402 = vpop.f32.mrb[0].mxu0
        %403 = vmatprep.mubr.bf16.mxu0 0
        %404 = vmatmul.mubr.bf16.gmra.mrb[0].mxu0 %v313
        %v405 = vpop.f32.mrb[0].mxu0
        %v406 = vadd.f32 %v264, %v405
        %v407 = vpop.f32.mrb[0].mxu0
        %v408 = vpop.f32.mrb[0].mxu0
        %v409 = vadd.f32 %v264, %v408
        %v410 = vpop.f32.mrb[0].mxu0
        %411 = vdwg.mxu0
        %v412 = vmax.f32 %v350, 0.0
        %v413 = vmax.f32 %v353, 0.0
        %v414 = vmax.f32 %v358, 0.0
        %v415 = vmax.f32 %v361, 0.0
        %v416 = vmax.f32 %v366, 0.0
        %v417 = vmax.f32 %v369, 0.0
        %v418 = vmax.f32 %v374, 0.0
        %v419 = vmax.f32 %v377, 0.0
        %v420 = vmax.f32 %v382, 0.0
        %v421 = vmax.f32 %v385, 0.0
        %v422 = vmax.f32 %v390, 0.0
        %v423 = vmax.f32 %v393, 0.0
        %v424 = vmax.f32 %v398, 0.0
        %v425 = vmax.f32 %v401, 0.0
        %v426 = vmax.f32 %v406, 0.0
        %v427 = vmax.f32 %v409, 0.0
        %v428 = vpack.c.bf16 %v413, %v412
        %v429 = vpack.c.bf16 %v415, %v414
        %v430 = vpack.c.bf16 %v417, %v416
        %v431 = vpack.c.bf16 %v419, %v418
        %v432 = vpack.c.bf16 %v421, %v420
        %v433 = vpack.c.bf16 %v423, %v422
        %v434 = vpack.c.bf16 %v425, %v424
        %v435 = vpack.c.bf16 %v427, %v426
        %v436 = vld [vmem:[%s3] sm:$0xf]
        %v437 = vld [vmem:[%s3 + $0x4] sm:$0xf]
        %v438 = vld [vmem:[%s3 + $0x8] sm:$0xf]
        %v439 = vld [vmem:[%s3 + $0xc] sm:$0xf]
        %v440 = vld [vmem:[%s3 + $0x10] sm:$0xf]
        %v441 = vld [vmem:[%s3 + $0x14] sm:$0xf]
        %v442 = vld [vmem:[%s3 + $0x18] sm:$0xf]
        %v443 = vld [vmem:[%s3 + $0x1c] sm:$0xf]
        %v444 = vld [vmem:[%s3 + $0x20] sm:$0xf]
        %v445 = vld [vmem:[%s3 + $0x24] sm:$0xf]
        %v446 = vld [vmem:[%s3 + $0x28] sm:$0xf]
        %v447 = vld [vmem:[%s3 + $0x2c] sm:$0xf]
        %v448 = vld [vmem:[%s3 + $0x30] sm:$0xf]
        %v449 = vld [vmem:[%s3 + $0x34] sm:$0xf]
        %v450 = vld [vmem:[%s3 + $0x38] sm:$0xf]
        %v451 = vld [vmem:[%s3 + $0x3c] sm:$0xf]
        %v452 = vld [vmem:[%s4] sm:$0x1]
        %v454 = vlaneseq
        %v455 = vshrl.u32 %v454, 7
        %v456 = vsub.s32 0, %v455
        %v457 = vrot.slane %v452, %v456
        %v475 = vunpack.c.l.b16 %v436
        %v476 = vunpack.c.l.b16 %v437
        %v477 = vunpack.c.l.b16 %v438
        %v478 = vunpack.c.l.b16 %v439
        %v479 = vunpack.c.l.b16 %v440
        %v480 = vunpack.c.l.b16 %v441
        %v481 = vunpack.c.l.b16 %v442
        %v482 = vunpack.c.l.b16 %v443
        %v483 = vunpack.c.l.b16 %v444
        %v484 = vunpack.c.l.b16 %v445
        %v485 = vunpack.c.l.b16 %v446
        %v486 = vunpack.c.l.b16 %v447
        %v487 = vunpack.c.l.b16 %v448
        %v488 = vunpack.c.l.b16 %v449
        %v489 = vunpack.c.l.b16 %v450
        %v490 = vunpack.c.l.b16 %v451
        %v491 = vpack.c.b16 %v476, %v475
        %v492 = vpack.c.b16 %v478, %v477
        %v493 = vpack.c.b16 %v480, %v479
        %v494 = vpack.c.b16 %v482, %v481
        %v495 = vpack.c.b16 %v484, %v483
        %v496 = vpack.c.b16 %v486, %v485
        %v497 = vpack.c.b16 %v488, %v487
        %v498 = vpack.c.b16 %v490, %v489
        %507 = vmatprep.subr.bf16.mxu0 0
        %508 = vmatpush1.bf16.msra.mxu0 %v491
        %509 = vmatprep.subr.bf16.mxu0 0
        %510 = vmatpush1.bf16.msra.mxu0 %v492
        %511 = vmatprep.subr.bf16.mxu0 0
        %512 = vmatpush1.bf16.msra.mxu0 %v493
        %513 = vmatprep.subr.bf16.mxu0 0
        %514 = vmatpush1.bf16.msra.mxu0 %v494
        %515 = vmatprep.subr.bf16.mxu0 0
        %516 = vmatpush1.bf16.msra.mxu0 %v495
        %517 = vmatprep.subr.bf16.mxu0 0
        %518 = vmatpush1.bf16.msra.mxu0 %v496
        %519 = vmatprep.subr.bf16.mxu0 0
        %520 = vmatpush1.bf16.msra.mxu0 %v497
        %521 = vmatprep.subr.bf16.mxu0 0
        %522 = vmatpush1.bf16.msra.mxu0 %v498
        %523 = vmatprep.subr.bf16.mxu0 0
        %524 = vmatpush1.bf16.msra.mxu0 0
        %525 = vmatprep.subr.bf16.mxu0 0
        %526 = vmatpush1.bf16.msra.mxu0 0
        %527 = vmatprep.subr.bf16.mxu0 0
        %528 = vmatpush1.bf16.msra.mxu0 0
        %529 = vmatprep.subr.bf16.mxu0 0
        %530 = vmatpush1.bf16.msra.mxu0 0
        %531 = vmatprep.subr.bf16.mxu0 0
        %532 = vmatpush1.bf16.msra.mxu0 0
        %533 = vmatprep.subr.bf16.mxu0 0
        %534 = vmatpush1.bf16.msra.mxu0 0
        %535 = vmatprep.subr.bf16.mxu0 0
        %536 = vmatpush1.bf16.msra.mxu0 0
        %537 = vmatprep.subr.bf16.mxu0 0
        %538 = vmatpush1.bf16.msra.mxu0 0
        %539 = vmatprep.mubr.bf16.mxu0 0
        %540 = vmatmul.mubr.bf16.gmra.mrb[0].mxu0 %v428
        %v541 = vpop.f32.mrb[0].mxu0
        %v542 = vadd.f32 %v457, %v541
        %v543 = vpop.f32.mrb[0].mxu0
        %v544 = vpop.f32.mrb[0].mxu0
        %v545 = vadd.f32 %v457, %v544
        %v546 = vpop.f32.mrb[0].mxu0
        %547 = vmatprep.mubr.bf16.mxu0 0
        %548 = vmatmul.mubr.bf16.gmra.mrb[0].mxu0 %v429
        %v549 = vpop.f32.mrb[0].mxu0
        %v550 = vadd.f32 %v457, %v549
        %v551 = vpop.f32.mrb[0].mxu0
        %v552 = vpop.f32.mrb[0].mxu0
        %v553 = vadd.f32 %v457, %v552
        %v554 = vpop.f32.mrb[0].mxu0
        %555 = vmatprep.mubr.bf16.mxu0 0
        %556 = vmatmul.mubr.bf16.gmra.mrb[0].mxu0 %v430
        %v557 = vpop.f32.mrb[0].mxu0
        %v558 = vadd.f32 %v457, %v557
        %v559 = vpop.f32.mrb[0].mxu0
        %v560 = vpop.f32.mrb[0].mxu0
        %v561 = vadd.f32 %v457, %v560
        %v562 = vpop.f32.mrb[0].mxu0
        %563 = vmatprep.mubr.bf16.mxu0 0
        %564 = vmatmul.mubr.bf16.gmra.mrb[0].mxu0 %v431
        %v565 = vpop.f32.mrb[0].mxu0
        %v566 = vadd.f32 %v457, %v565
        %v567 = vpop.f32.mrb[0].mxu0
        %v568 = vpop.f32.mrb[0].mxu0
        %v569 = vadd.f32 %v457, %v568
        %v570 = vpop.f32.mrb[0].mxu0
        %571 = vmatprep.mubr.bf16.mxu0 0
        %572 = vmatmul.mubr.bf16.gmra.mrb[0].mxu0 %v432
        %v573 = vpop.f32.mrb[0].mxu0
        %v574 = vadd.f32 %v457, %v573
        %v575 = vpop.f32.mrb[0].mxu0
        %v576 = vpop.f32.mrb[0].mxu0
        %v577 = vadd.f32 %v457, %v576
        %v578 = vpop.f32.mrb[0].mxu0
        %579 = vmatprep.mubr.bf16.mxu0 0
        %580 = vmatmul.mubr.bf16.gmra.mrb[0].mxu0 %v433
        %v581 = vpop.f32.mrb[0].mxu0
        %v582 = vadd.f32 %v457, %v581
        %v583 = vpop.f32.mrb[0].mxu0
        %v584 = vpop.f32.mrb[0].mxu0
        %v585 = vadd.f32 %v457, %v584
        %v586 = vpop.f32.mrb[0].mxu0
        %587 = vmatprep.mubr.bf16.mxu0 0
        %588 = vmatmul.mubr.bf16.gmra.mrb[0].mxu0 %v434
        %v589 = vpop.f32.mrb[0].mxu0
        %v590 = vadd.f32 %v457, %v589
        %v591 = vpop.f32.mrb[0].mxu0
        %v592 = vpop.f32.mrb[0].mxu0
        %v593 = vadd.f32 %v457, %v592
        %v594 = vpop.f32.mrb[0].mxu0
        %595 = vmatprep.mubr.bf16.mxu0 0
        %596 = vmatmul.mubr.bf16.gmra.mrb[0].mxu0 %v435
        %v597 = vpop.f32.mrb[0].mxu0
        %v598 = vadd.f32 %v457, %v597
        %v599 = vpop.f32.mrb[0].mxu0
        %v600 = vpop.f32.mrb[0].mxu0
        %v601 = vadd.f32 %v457, %v600
        %v602 = vpop.f32.mrb[0].mxu0
        %603 = vdwg.mxu0
        %v604 = vpack.c.bf16 %v545, %v542
        %v605 = vpack.c.bf16 %v553, %v550
        %v606 = vpack.c.bf16 %v561, %v558
        %v607 = vpack.c.bf16 %v569, %v566
        %v608 = vpack.c.bf16 %v577, %v574
        %v609 = vpack.c.bf16 %v585, %v582
        %v610 = vpack.c.bf16 %v593, %v590
        %v611 = vpack.c.bf16 %v601, %v598
        %v620 = vunpack.c.l.b16 %v604
        %v621 = vunpack.c.h.b16 %v604
        %v622 = vunpack.c.l.b16 %v605
        %v623 = vunpack.c.h.b16 %v605
        %v624 = vunpack.c.l.b16 %v606
        %v625 = vunpack.c.h.b16 %v606
        %v626 = vunpack.c.l.b16 %v607
        %v627 = vunpack.c.h.b16 %v607
        %v628 = vunpack.c.l.b16 %v608
        %v629 = vunpack.c.h.b16 %v608
        %v630 = vunpack.c.l.b16 %v609
        %v631 = vunpack.c.h.b16 %v609
        %v632 = vunpack.c.l.b16 %v610
        %v633 = vunpack.c.h.b16 %v610
        %v634 = vunpack.c.l.b16 %v611
        %v635 = vunpack.c.h.b16 %v611
        %v636 = vpack.c.b16 %v620, %v620
        %v637 = vpack.c.b16 %v621, %v621
        %v638 = vpack.c.b16 %v622, %v622
        %v639 = vpack.c.b16 %v623, %v623
        %v640 = vpack.c.b16 %v624, %v624
        %v641 = vpack.c.b16 %v625, %v625
        %v642 = vpack.c.b16 %v626, %v626
        %v643 = vpack.c.b16 %v627, %v627
        %v644 = vpack.c.b16 %v628, %v628
        %v645 = vpack.c.b16 %v629, %v629
        %v646 = vpack.c.b16 %v630, %v630
        %v647 = vpack.c.b16 %v631, %v631
        %v648 = vpack.c.b16 %v632, %v632
        %v649 = vpack.c.b16 %v633, %v633
        %v650 = vpack.c.b16 %v634, %v634
        %v651 = vpack.c.b16 %v635, %v635
        %668 = vst [vmem:[%s218] sm:$0xf] %v636
        %669 = vst [vmem:[%s218 + $0x4] sm:$0xf] %v637
        %670 = vst [vmem:[%s218 + $0x8] sm:$0xf] %v638
        %671 = vst [vmem:[%s218 + $0xc] sm:$0xf] %v639
        %672 = vst [vmem:[%s218 + $0x10] sm:$0xf] %v640
        %673 = vst [vmem:[%s218 + $0x14] sm:$0xf] %v641
        %674 = vst [vmem:[%s218 + $0x18] sm:$0xf] %v642
        %675 = vst [vmem:[%s218 + $0x1c] sm:$0xf] %v643
        %676 = vst [vmem:[%s218 + $0x20] sm:$0xf] %v644
        %677 = vst [vmem:[%s218 + $0x24] sm:$0xf] %v645
        %678 = vst [vmem:[%s218 + $0x28] sm:$0xf] %v646
        %679 = vst [vmem:[%s218 + $0x2c] sm:$0xf] %v647
        %680 = vst [vmem:[%s218 + $0x30] sm:$0xf] %v648
        %681 = vst [vmem:[%s218 + $0x34] sm:$0xf] %v649
        %682 = vst [vmem:[%s218 + $0x38] sm:$0xf] %v650
        %683 = vst [vmem:[%s218 + $0x3c] sm:$0xf] %v651
        %s684 = sand.u32 %s137, 1
        %s685 = scalar_lea.sflag [#allocation3], %s684
        %s686 = sand.u32 %s137, 1
        %s687 = smul.addr %s686, 64
        %s688 = scalar_lea.vmem [#allocation2], %s687
        // Predicated region
        $region41: #{tpu_custom_call.1} parent=39 // pred_check
          %p689 = pneg %p147
        $region42: #{tpu_custom_call.1} parent=39 // pred_check_branch
          %691 = sbr.rel (%p689) target = $region44
        $region43: #{tpu_custom_call.1} parent=39 // pred_region
          %s692 = smul.u32 16, %s19
          %s694 = ssub.s32 1024, 1024
          %695 = vsyncadd %s685, %s694
          %s696 = smul.addr %s692, 64
          %s697 = scalar_lea.hbm %s5, %s696
          %s698 = sshll.u32 %s688, 4
          %s699 = int_to_ptr.vmem [resolvable:$true] %s698
          %704 = dma.vmem_to_hbm [thread:$0]  %s699, 1024, %s697, %s685, 64, 64, 4
        $region44: #{tpu_custom_call.1} parent=39 // pred_fallthru
          _
      $region40: #{tpu_custom_call.1} parent=5 // pred_fallthru
        _
      %p705 = scmp.le.s32.totalorder 2, %s14
      // Predicated region
      $region45: #{tpu_custom_call.1} parent=5 // pred_check
        %p706 = pneg %p705
      $region46: #{tpu_custom_call.1} parent=5 // pred_check_branch
        %708 = sbr.rel (%p706) target = $region48
      $region47: #{tpu_custom_call.1} parent=5 // pred_region
        %s709 = ssub.s32 %s14, 2
        // Predicated region
        $region49: #{tpu_custom_call.1} parent=47 // pred_check
          %p710 = pneg %p153
        $region50: #{tpu_custom_call.1} parent=47 // pred_check_branch
          %712 = sbr.rel (%p710) target = $region52
        $region51: #{tpu_custom_call.1} parent=47 // pred_region
          %s713 = sand.u32 %s138, 1
          %s714 = scalar_lea.sflag [#allocation3], %s713
          %s715 = sand.u32 %s138, 1
          %s716 = smul.addr %s715, 64
          %s717 = scalar_lea.vmem [#allocation2], %s716
          %718 = dma.done %s714, 1024
        $region52: #{tpu_custom_call.1} parent=47 // pred_fallthru
          _
      $region48: #{tpu_custom_call.1} parent=5 // pred_fallthru
        _
    $region6: #{tpu_custom_call.1} parent=1 // loop_footer
      %s18 = sadd.s32 1, %s14
    $region7: #{tpu_custom_call.1} parent=1 // loop_footer_branch
      %13 = sbr.rel target = $region3
    $region8: #{tpu_custom_call.1} parent=1 // loop_exit
      _
    %719 = vsyncpa [#allocation3], 1
    %s720 = scalar_lea.sflag [#allocation3], 1
    %721 = vsyncpa %s720, 1

</llo_original>
